<compile_context>
chip_gen: v7x
topology: tpu7x:2x2x1
jax: 0.10.0
libtpu: 0.0.40
codegen_flags: <defaults>
</compile_context>

<pallas_src>
import functools
import math

import jax
import jax.numpy as jnp
import numpy as np
from jax.experimental import pallas as pl
from jax.experimental.pallas import tpu as pltpu


# ------------------------------- kernel ------------------------------------

def _stacked_mhsa_kernel(x_ref, wqkv_ref, wo_ref, bo_ref, o_ref,
                         x_carry, acc_ref, *,
                         num_heads, head_size, embedding_dim, exp_dtype):
    """One (batch-element, layer) grid step of StackedMHSA.

    Block views:
      x_ref    : (1, N, E)        f32   original input (consumed at l == 0)
      wqkv_ref : (1, H, E, 3*hs)  bf16  fused per-head [Wq/sqrt(hs) | Wk | Wv]
      wo_ref   : (1, H, hs, Vp)   bf16  per-head slice of head_combine weight
      bo_ref   : (1, 1, Vp)       f32   head_combine bias (zero-padded to Vp)
      o_ref    : (1, N, Vp)             output (written at l == L-1 only)
      x_carry  : (N, E)  f32 scratch    residual stream, persists across grid
      acc_ref  : (N, Vp) f32 scratch    per-layer head-sum accumulator
    """
    hs = head_size
    E = embedding_dim
    l = pl.program_id(1)
    num_layers = pl.num_programs(1)

    @pl.when(l == 0)
    def _():
        x_carry[...] = x_ref[0].astype(jnp.float32)

    x = x_carry[...]                        # (N, E) f32 residual stream
    x_bf = x.astype(jnp.bfloat16)           # MXU operand

    acc_ref[...] = jnp.zeros_like(acc_ref)

    def head_body(h, carry):
        # One fused (E, 3*hs)-wide projection per head; the 1/sqrt(hs) scale
        # is already folded into the Wq columns at weight-prep time.
        qkv = jnp.dot(x_bf, wqkv_ref[0, h],
                      preferred_element_type=jnp.float32)            # (N, 3hs)
        q = qkv[:, 0:hs]
        k = qkv[:, hs:2 * hs]
        v = qkv[:, 2 * hs:3 * hs]

        logits = jax.lax.dot_general(
            q.astype(jnp.bfloat16), k.astype(jnp.bfloat16),
            (((1,), (1,)), ((), ())),
            preferred_element_type=jnp.float32)                       # (N, N)

        m = jnp.max(logits, axis=-1, keepdims=True)
        # exp in bf16 where the EUP supports it (v6e/v7x); f32 on v5e.
        e = jnp.exp((logits - m).astype(exp_dtype))
        denom = jnp.sum(e.astype(jnp.float32), axis=-1, keepdims=True)  # (N,1)

        # Deferred softmax normalization: normalize AFTER the PV matmul so it
        # costs N*hs multiplies instead of N^2.
        pv = jnp.dot(e.astype(jnp.bfloat16), v.astype(jnp.bfloat16),
                     preferred_element_type=jnp.float32)              # (N, hs)
        head_out = pv * pl.reciprocal(denom, approx=True)             # EUP

        # Head-concat + output projection folded into an accumulate.
        acc_ref[...] += jnp.dot(head_out.astype(jnp.bfloat16), wo_ref[0, h],
                                preferred_element_type=jnp.float32)   # (N, Vp)
        return carry

    # fori_loop (not a Python unroll) bounds the live range of the (N, N)
    # logits / exp tensors to a single head.
    jax.lax.fori_loop(0, num_heads, head_body, 0)

    new_x = acc_ref[...] + bo_ref[0]                                   # (N, Vp)

    @pl.when(l < num_layers - 1)
    def _():
        x_carry[...] = x + new_x[:, :E]        # residual, stays in VMEM

    @pl.when(l == num_layers - 1)
    def _():
        o_ref[0] = new_x.astype(o_ref.dtype)

    # TODO(synk): for large N, replace the dense (N, N) attention with a
    # KV-tiled online-softmax (flash-style) loop so only (N, tkv) logits are
    # live at once (critical on v7x's 64 MiB VMEM).
    # TODO(synk): for small N, take a tile of batch elements per grid step and
    # flatten (bB*N, E) into the projection matmuls to fill the 256-row MXU
    # and amortize per-grid-step overhead.


# ------------------------------- wrapper ------------------------------------

def _default_exp_dtype():
    """bf16 exp only on chips with a bf16 EUP (v6e / v7x); f32 elsewhere."""
    try:
        kind = jax.devices()[0].device_kind.lower()
    except Exception:
        return jnp.float32
    if any(tag in kind for tag in ("v6", "v7", "tpu7")):
        return jnp.bfloat16
    return jnp.float32


def _vmem_limit_bytes(N, E, H, hs, Vp):
    bf16, f32 = 2, 4
    # One layer's weights (pipeline double-buffers: current + prefetch of l+1).
    w_layer = H * E * 3 * hs * bf16 + H * hs * Vp * bf16 + Vp * f32
    x_block = N * E * f32
    out_block = N * Vp * f32
    scratch = N * E * f32 + N * Vp * f32
    # Per-head in-flight intermediates (logits, exp, qkv, pv, x_bf).
    interm = 2 * N * N * f32 + N * 3 * hs * f32 + 2 * N * hs * f32 + N * E * bf16
    est = 2 * (w_layer + x_block + out_block) + scratch + interm
    # Headroom for (8,128) tile padding + compiler temporaries; clamp so the
    # request is valid on every generation (v7x physical VMEM = 64 MiB / TC).
    return int(min(64 * 2 ** 20, max(32 * 2 ** 20, 2 * est)))


def stacked_mhsa_forward(point_feats, kparams, *, exp_dtype=None):
    """Fused StackedMHSA forward.  point_feats: (B, N, E) f32."""
    B, N, E = point_feats.shape
    wqkv_all = kparams["wqkv"]        # (L, H, E, 3*hs) bf16
    wo_all = kparams["wo"]            # (L, H, hs, Vp)  bf16
    bo_all = kparams["bo"]            # (L, 1, Vp)      f32
    value_dim = kparams["value_dim"]

    L, H, E_w, three_hs = wqkv_all.shape
    hs = three_hs // 3
    Vp = wo_all.shape[-1]
    assert E_w == E and H * hs == E, "inconsistent prepared parameters"

    if exp_dtype is None:
        exp_dtype = _default_exp_dtype()

    kernel = functools.partial(
        _stacked_mhsa_kernel, num_heads=H, head_size=hs,
        embedding_dim=E, exp_dtype=exp_dtype)

    out = pl.pallas_call(
        kernel,
        out_shape=jax.ShapeDtypeStruct((B, N, Vp), point_feats.dtype),
        grid_spec=pltpu.PrefetchScalarGridSpec(
            num_scalar_prefetch=0,
            grid=(B, L),                              # layer axis innermost
            in_specs=[
                pl.BlockSpec((1, N, E), lambda b, l: (b, 0, 0)),
                pl.BlockSpec((1, H, E, three_hs), lambda b, l: (l, 0, 0, 0)),
                pl.BlockSpec((1, H, hs, Vp), lambda b, l: (l, 0, 0, 0)),
                pl.BlockSpec((1, 1, Vp), lambda b, l: (l, 0, 0)),
            ],
            out_specs=pl.BlockSpec((1, N, Vp), lambda b, l: (b, 0, 0)),
            scratch_shapes=[
                pltpu.VMEM((N, E), jnp.float32),      # residual stream
                pltpu.VMEM((N, Vp), jnp.float32),     # head accumulator
            ]),
        compiler_params=pltpu.CompilerParams(
            dimension_semantics=("parallel", "arbitrary"),
            vmem_limit_bytes=_vmem_limit_bytes(N, E, H, hs, Vp)),
    )(point_feats, wqkv_all, wo_all, bo_all)

    return out[:, :, :value_dim] if value_dim != Vp else out


# ----------------------------- parameters -----------------------------------

def _xavier_normal(key, out_features, in_features):
    std = math.sqrt(2.0 / (in_features + out_features))
    return jax.random.normal(key, (out_features, in_features), jnp.float32) * std


def init_stacked_mhsa_params(key, embedding_dim, value_dim, num_heads, num_layers):
    """PyTorch-layout parameters: weight = (out, in), bias = (out,)."""
    params = []
    for layer in range(num_layers):
        out_dim = value_dim if layer == num_layers - 1 else embedding_dim
        key, k1, k2, k3, k4 = jax.random.split(key, 5)
        params.append(dict(
            wk=_xavier_normal(k1, embedding_dim, embedding_dim),
            wq=_xavier_normal(k2, embedding_dim, embedding_dim),
            wv=_xavier_normal(k3, embedding_dim, embedding_dim),
            wo=_xavier_normal(k4, out_dim, embedding_dim),
            bo=jnp.zeros((out_dim,), jnp.float32),
        ))
    return params


def prepare_kernel_params(params, num_heads):
    """Fuse/scale/split/stack the PyTorch-layout weights for the kernel.

    * 1/sqrt(head_size) folded into Wq.
    * Q, K, V fused per head into (H, E, 3*hs) with column order [q | k | v].
    * head_combine padded on its output axis to Vp = max(E, value_dim) so all
      layers share one stacked operand (extra columns are zero).
    """
    num_layers = len(params)
    E = params[0]["wq"].shape[1]
    hs = E // num_heads
    scale = 1.0 / math.sqrt(hs)
    out_dims = [p["wo"].shape[0] for p in params]
    Vp = max([E] + out_dims)

    def split_heads(w):        # (out=E, in=E) -> (H, E_in, hs)
        return jnp.transpose(w.T.reshape(E, num_heads, hs), (1, 0, 2))

    wqkv_layers, wo_layers, bo_layers = [], [], []
    for p in params:
        out_dim = p["wo"].shape[0]
        wq_h = split_heads(p["wq"]) * scale       # scale folded into Wq
        wk_h = split_heads(p["wk"])
        wv_h = split_heads(p["wv"])
        wqkv_layers.append(
            jnp.concatenate([wq_h, wk_h, wv_h], axis=-1).astype(jnp.bfloat16))

        wo_h = p["wo"].T.reshape(num_heads, hs, out_dim)
        bo = p["bo"].reshape(1, out_dim)
        if out_dim < Vp:
            wo_h = jnp.pad(wo_h, ((0, 0), (0, 0), (0, Vp - out_dim)))
            bo = jnp.pad(bo, ((0, 0), (0, Vp - out_dim)))
        wo_layers.append(wo_h.astype(jnp.bfloat16))
        bo_layers.append(bo.astype(jnp.float32))

    return dict(
        wqkv=jnp.stack(wqkv_layers),     # (L, H, E, 3*hs)
        wo=jnp.stack(wo_layers),         # (L, H, hs, Vp)
        bo=jnp.stack(bo_layers),         # (L, 1, Vp)
        value_dim=out_dims[-1],
    )


# ----------------------------- pure-JAX reference ---------------------------

def stacked_mhsa_reference(point_feats, params, num_heads):
    x = point_feats
    num_layers = len(params)
    for n, p in enumerate(params):
        E = p["wq"].shape[1]
        hs = E // num_heads
        B, N, _ = x.shape
        k = x @ p["wk"].T
        q = x @ p["wq"].T
        v = x @ p["wv"].T

        def heads(t):
            return jnp.transpose(t.reshape(B, N, num_heads, hs), (0, 2, 1, 3))

        qh, kh, vh = heads(q), heads(k), heads(v)
        logits = jnp.einsum("bhnd,bhmd->bhnm", qh, kh) / math.sqrt(hs)
        w = jax.nn.softmax(logits, axis=-1)
        attn = jnp.einsum("bhnm,bhmd->bhnd", w, vh)
        concat = jnp.transpose(attn, (0, 2, 1, 3)).reshape(B, N, E)
        new_x = concat @ p["wo"].T + p["bo"]
        x = x + new_x if n != num_layers - 1 else new_x
    return x


# --------------------------------- main --------------------------------------

if __name__ == "__main__":
    batch = 2
    num_points = 8
    embedding_dim = 32
    value_dim = 16
    num_heads = 4
    num_layers = 3

    key = jax.random.PRNGKey(0)
    key, xkey = jax.random.split(key)
    point_feats = jax.random.normal(
        xkey, (batch, num_points, embedding_dim), jnp.float32)

    params = init_stacked_mhsa_params(key, embedding_dim, value_dim,
                                      num_heads, num_layers)
    kparams = prepare_kernel_params(params, num_heads)

    out = stacked_mhsa_forward(point_feats, kparams)
    out = jax.block_until_ready(out)

    assert out.shape == (batch, num_points, value_dim), out.shape
    assert np.all(np.isfinite(np.asarray(out)))

    # Correctness vs f32 reference. Tolerance is loose by design: bf16 MXU
    # operands, bf16 exp (on v6e/v7x), and approx reciprocal.
    ref = stacked_mhsa_reference(point_feats, params, num_heads)
    err = float(jnp.max(jnp.abs(out - ref)))
    assert err < 0.2, f"max abs err {err}"

    print("KERNEL_OK")
</pallas_src>

<mosaic_0001>
module attributes {stable_mosaic.version = 11 : i64} {
  func.func @_stacked_mhsa_kernel(%arg0: i32, %arg1: i32, %arg2: memref<1x8x32xf32, #tpu.memory_space<vmem>>, %arg3: memref<1x4x32x24xbf16, #tpu.memory_space<vmem>>, %arg4: memref<1x4x8x32xbf16, #tpu.memory_space<vmem>>, %arg5: memref<1x1x32xf32, #tpu.memory_space<vmem>>, %arg6: memref<1x8x32xf32, #tpu.memory_space<vmem>>, %arg7: memref<8x32xf32, #tpu.memory_space<vmem>>, %arg8: memref<8x32xf32, #tpu.memory_space<vmem>>) attributes {dimension_semantics = [#tpu.dimension_semantics<parallel>, #tpu.dimension_semantics<arbitrary>], iteration_bounds = array<i64: 2, 3>, scalar_prefetch = 0 : i64, scratch_operands = 2 : i64, tpu.core_type = #tpu.core_type<tc>, window_params = [{transform_indices = @transform_0, window_bounds = array<i64: 1, 8, 32>}, {transform_indices = @transform_1, window_bounds = array<i64: 1, 4, 32, 24>}, {transform_indices = @transform_2, window_bounds = array<i64: 1, 4, 8, 32>}, {transform_indices = @transform_3, window_bounds = array<i64: 1, 1, 32>}, {transform_indices = @transform_4, window_bounds = array<i64: 1, 8, 32>}]} {
    %c0_i32 = arith.constant 0 : i32
    %0 = arith.cmpi eq, %arg1, %c0_i32 : i32
    %1 = arith.extui %0 : i1 to i32
    %c0_i32_0 = arith.constant 0 : i32
    %2 = arith.cmpi ne, %1, %c0_i32_0 : i32
    scf.if %2 {
      %c0_14 = arith.constant 0 : index
      %c0_15 = arith.constant 0 : index
      %c0_16 = arith.constant 0 : index
      %19 = vector.load %arg2[%c0_14, %c0_15, %c0_16] : memref<1x8x32xf32, #tpu.memory_space<vmem>>, vector<1x8x32xf32>
      %20 = vector.shape_cast %19 : vector<1x8x32xf32> to vector<8x32xf32>
      %c0_17 = arith.constant 0 : index
      %c0_18 = arith.constant 0 : index
      %21 = vector.load %arg7[%c0_17, %c0_18] : memref<8x32xf32, #tpu.memory_space<vmem>>, vector<8x32xf32>
      tpu.vector_store %arg7[%c0_17, %c0_18], %20 {strides = array<i32>} : memref<8x32xf32, #tpu.memory_space<vmem>>, vector<8x32xf32>,
    } else {
    }
    %c0 = arith.constant 0 : index
    %c0_1 = arith.constant 0 : index
    %3 = vector.load %arg7[%c0, %c0_1] : memref<8x32xf32, #tpu.memory_space<vmem>>, vector<8x32xf32>
    %4 = arith.truncf %3 : vector<8x32xf32> to vector<8x32xbf16>
    %cst = arith.constant 0.000000e+00 : f32
    %5 = vector.broadcast %cst : f32 to vector<8x32xf32>
    %c0_2 = arith.constant 0 : index
    %c0_3 = arith.constant 0 : index
    %6 = vector.load %arg8[%c0_2, %c0_3] : memref<8x32xf32, #tpu.memory_space<vmem>>, vector<8x32xf32>
    tpu.vector_store %arg8[%c0_2, %c0_3], %5 {strides = array<i32>} : memref<8x32xf32, #tpu.memory_space<vmem>>, vector<8x32xf32>,
    %c0_i32_4 = arith.constant 0 : i32
    %c4_i32 = arith.constant 4 : i32
    %7 = arith.addi %c0_i32_4, %c4_i32 : i32
    %c1_i32 = arith.constant 1 : i32
    scf.for %arg9 = %c0_i32_4 to %7 step %c1_i32  : i32 {
      %c0_14 = arith.constant 0 : index
      %19 = arith.index_cast %arg9 : i32 to index
      %c0_15 = arith.constant 0 : index
      %c0_16 = arith.constant 0 : index
      %20 = vector.load %arg3[%c0_14, %19, %c0_15, %c0_16] : memref<1x4x32x24xbf16, #tpu.memory_space<vmem>>, vector<1x1x32x24xbf16>
      %21 = vector.shape_cast %20 : vector<1x1x32x24xbf16> to vector<32x24xbf16>
      %cst_17 = arith.constant dense<0.000000e+00> : vector<8x24xf32>
      %22 = tpu.matmul %4, %21, %cst_17 {dimension_numbers = #tpu.dot_dimension_numbers<[1], [0], [0], [1], [0, 0, 1, 1], [], []>} : vector<8x32xbf16>, vector<32x24xbf16>, vector<8x24xf32> -> vector<8x24xf32>
      %23 = vector.extract_strided_slice %22 {offsets = [0, 0], sizes = [8, 8], strides = [1, 1]} : vector<8x24xf32> to vector<8x8xf32>
      %24 = vector.extract_strided_slice %22 {offsets = [0, 8], sizes = [8, 8], strides = [1, 1]} : vector<8x24xf32> to vector<8x8xf32>
      %25 = vector.extract_strided_slice %22 {offsets = [0, 16], sizes = [8, 8], strides = [1, 1]} : vector<8x24xf32> to vector<8x8xf32>
      %26 = arith.truncf %23 : vector<8x8xf32> to vector<8x8xbf16>
      %27 = arith.truncf %24 : vector<8x8xf32> to vector<8x8xbf16>
      %cst_18 = arith.constant dense<0.000000e+00> : vector<8x8xf32>
      %28 = tpu.matmul %26, %27, %cst_18 {dimension_numbers = #tpu.dot_dimension_numbers<[1], [1], [0], [0], [0, 0, 1, 0], [], []>} : vector<8x8xbf16>, vector<8x8xbf16>, vector<8x8xf32> -> vector<8x8xf32>
      %cst_19 = arith.constant dense<0xFF800000> : vector<8xf32>
      %29 = vector.multi_reduction <maximumf>, %28, %cst_19 [1] : vector<8x8xf32> to vector<8xf32>
      %30 = vector.shape_cast %29 : vector<8xf32> to vector<8x1xf32>
      %31 = vector.broadcast %30 : vector<8x1xf32> to vector<8x8xf32>
      %32 = arith.subf %28, %31 : vector<8x8xf32>
      %33 = math.exp %32 : vector<8x8xf32>
      %cst_20 = arith.constant dense<0.000000e+00> : vector<8xf32>
      %34 = vector.multi_reduction <add>, %33, %cst_20 [1] : vector<8x8xf32> to vector<8xf32>
      %35 = vector.shape_cast %34 : vector<8xf32> to vector<8x1xf32>
      %36 = arith.truncf %33 : vector<8x8xf32> to vector<8x8xbf16>
      %37 = arith.truncf %25 : vector<8x8xf32> to vector<8x8xbf16>
      %cst_21 = arith.constant dense<0.000000e+00> : vector<8x8xf32>
      %38 = tpu.matmul %36, %37, %cst_21 {dimension_numbers = #tpu.dot_dimension_numbers<[1], [0], [0], [1], [0, 0, 1, 1], [], []>} : vector<8x8xbf16>, vector<8x8xbf16>, vector<8x8xf32> -> vector<8x8xf32>
      %39 = tpu.reciprocal %35 {approx = true} : vector<8x1xf32> -> vector<8x1xf32>
      %40 = vector.broadcast %39 : vector<8x1xf32> to vector<8x8xf32>
      %41 = arith.mulf %38, %40 : vector<8x8xf32>
      %c0_22 = arith.constant 0 : index
      %c0_23 = arith.constant 0 : index
      %42 = vector.load %arg8[%c0_22, %c0_23] : memref<8x32xf32, #tpu.memory_space<vmem>>, vector<8x32xf32>
      %43 = arith.truncf %41 : vector<8x8xf32> to vector<8x8xbf16>
      %c0_24 = arith.constant 0 : index
      %44 = arith.index_cast %arg9 : i32 to index
      %c0_25 = arith.constant 0 : index
      %c0_26 = arith.constant 0 : index
      %45 = vector.load %arg4[%c0_24, %44, %c0_25, %c0_26] : memref<1x4x8x32xbf16, #tpu.memory_space<vmem>>, vector<1x1x8x32xbf16>
      %46 = vector.shape_cast %45 : vector<1x1x8x32xbf16> to vector<8x32xbf16>
      %cst_27 = arith.constant dense<0.000000e+00> : vector<8x32xf32>
      %47 = tpu.matmul %43, %46, %cst_27 {dimension_numbers = #tpu.dot_dimension_numbers<[1], [0], [0], [1], [0, 0, 1, 1], [], []>} : vector<8x8xbf16>, vector<8x32xbf16>, vector<8x32xf32> -> vector<8x32xf32>
      %48 = arith.addf %42, %47 : vector<8x32xf32>
      %c0_28 = arith.constant 0 : index
      %c0_29 = arith.constant 0 : index
      %49 = vector.load %arg8[%c0_28, %c0_29] : memref<8x32xf32, #tpu.memory_space<vmem>>, vector<8x32xf32>
      tpu.vector_store %arg8[%c0_28, %c0_29], %48 {strides = array<i32>} : memref<8x32xf32, #tpu.memory_space<vmem>>, vector<8x32xf32>,
    }
    %c4_i32_5 = arith.constant 4 : i32
    %c0_6 = arith.constant 0 : index
    %c0_7 = arith.constant 0 : index
    %8 = vector.load %arg8[%c0_6, %c0_7] : memref<8x32xf32, #tpu.memory_space<vmem>>, vector<8x32xf32>
    %c0_8 = arith.constant 0 : index
    %c0_9 = arith.constant 0 : index
    %c0_10 = arith.constant 0 : index
    %9 = vector.load %arg5[%c0_8, %c0_9, %c0_10] : memref<1x1x32xf32, #tpu.memory_space<vmem>>, vector<1x1x32xf32>
    %10 = vector.shape_cast %9 : vector<1x1x32xf32> to vector<1x32xf32>
    %11 = vector.broadcast %10 : vector<1x32xf32> to vector<8x32xf32>
    %12 = arith.addf %8, %11 : vector<8x32xf32>
    %c2_i32 = arith.constant 2 : i32
    %13 = arith.cmpi slt, %arg1, %c2_i32 : i32
    %14 = arith.extui %13 : i1 to i32
    %c0_i32_11 = arith.constant 0 : i32
    %15 = arith.cmpi ne, %14, %c0_i32_11 : i32
    scf.if %15 {
      %19 = arith.addf %3, %12 : vector<8x32xf32>
      %c0_14 = arith.constant 0 : index
      %c0_15 = arith.constant 0 : index
      %20 = vector.load %arg7[%c0_14, %c0_15] : memref<8x32xf32, #tpu.memory_space<vmem>>, vector<8x32xf32>
      tpu.vector_store %arg7[%c0_14, %c0_15], %19 {strides = array<i32>} : memref<8x32xf32, #tpu.memory_space<vmem>>, vector<8x32xf32>,
    } else {
    }
    %c2_i32_12 = arith.constant 2 : i32
    %16 = arith.cmpi eq, %arg1, %c2_i32_12 : i32
    %17 = arith.extui %16 : i1 to i32
    %c0_i32_13 = arith.constant 0 : i32
    %18 = arith.cmpi ne, %17, %c0_i32_13 : i32
    scf.if %18 {
      %c0_14 = arith.constant 0 : index
      %c0_15 = arith.constant 0 : index
      %c0_16 = arith.constant 0 : index
      %19 = vector.load %arg6[%c0_14, %c0_15, %c0_16] : memref<1x8x32xf32, #tpu.memory_space<vmem>>, vector<1x8x32xf32>
      %20 = vector.shape_cast %19 : vector<1x8x32xf32> to vector<8x32xf32>
      %21 = vector.shape_cast %12 : vector<8x32xf32> to vector<1x8x32xf32>
      tpu.vector_store %arg6[%c0_14, %c0_15, %c0_16], %21 {strides = array<i32>} : memref<1x8x32xf32, #tpu.memory_space<vmem>>, vector<1x8x32xf32>,
    } else {
    }
    return
  }
  func.func @transform_0(%arg0: i32, %arg1: i32) -> (i32, i32, i32) {
    %c0_i32 = arith.constant 0 : i32
    %c0_i32_0 = arith.constant 0 : i32
    %c0_i32_1 = arith.constant 0 : i32
    return %arg0, %c0_i32, %c0_i32_0 : i32, i32, i32
  }
  func.func @transform_1(%arg0: i32, %arg1: i32) -> (i32, i32, i32, i32) {
    %c0_i32 = arith.constant 0 : i32
    %c0_i32_0 = arith.constant 0 : i32
    %c0_i32_1 = arith.constant 0 : i32
    %c0_i32_2 = arith.constant 0 : i32
    return %arg1, %c0_i32, %c0_i32_0, %c0_i32_1 : i32, i32, i32, i32
  }
  func.func @transform_2(%arg0: i32, %arg1: i32) -> (i32, i32, i32, i32) {
    %c0_i32 = arith.constant 0 : i32
    %c0_i32_0 = arith.constant 0 : i32
    %c0_i32_1 = arith.constant 0 : i32
    %c0_i32_2 = arith.constant 0 : i32
    return %arg1, %c0_i32, %c0_i32_0, %c0_i32_1 : i32, i32, i32, i32
  }
  func.func @transform_3(%arg0: i32, %arg1: i32) -> (i32, i32, i32) {
    %c0_i32 = arith.constant 0 : i32
    %c0_i32_0 = arith.constant 0 : i32
    %c0_i32_1 = arith.constant 0 : i32
    return %arg1, %c0_i32, %c0_i32_0 : i32, i32, i32
  }
  func.func @transform_4(%arg0: i32, %arg1: i32) -> (i32, i32, i32) {
    %c0_i32 = arith.constant 0 : i32
    %c0_i32_0 = arith.constant 0 : i32
    %c0_i32_1 = arith.constant 0 : i32
    return %arg0, %c0_i32, %c0_i32_0 : i32, i32, i32
  }
}

</mosaic_0001>

<llo_original>
// kernel: tpu_custom_call.1
$region0: #{tpu_custom_call.1}
  #allocation0 [shape = 'u32[]', space=smem, size = 0x4, offset = 0x4, fixed_abs, tag = 'smem constant byte address 0x4 - core index']
  #allocation1 [shape = 'u32[144,128]{1,0:T(1,128)}', space=vmem, size = 0x12000, scoped, tag = 'internal scratch']
  #allocation2 [shape = 'f32[8,32]{1,0:T(8,128)}', space=vmem, size = 0x1000, scoped, tag = 'scratch operand']
  #allocation3 [shape = 'f32[8,32]{1,0:T(8,128)}', space=vmem, size = 0x1000, scoped, tag = 'scratch operand']
  %s0 = inlined_call_operand.vmem [shape: f32[2,8,32], index: 0, kind: input, shape index: {}]
  %s1 = inlined_call_operand.vmem [shape: bf16[3,4,32,24], index: 1, kind: input, shape index: {}]
  %s2 = inlined_call_operand.vmem [shape: bf16[3,4,8,32], index: 2, kind: input, shape index: {}]
  %s3 = inlined_call_operand.vmem [shape: f32[3,1,32], index: 3, kind: input, shape index: {}]
  %s4 = inlined_call_operand.hbm [shape: f32[2,8,32], index: 4, kind: output, shape index: {}]
  %s5 = sld [smem:[#allocation0]]
  $region68: #{tpu_custom_call.1} parent=0
    _
  %s7 = ssub.s32 1, %s5
  %s8 = scalar_select 0, %s7, %s5
  $region1: #{tpu_custom_call.1} parent=0
    #allocation4 [shape = 'u8[8192]{0}', space=vmem, size = 0x2000, scoped, tag = 'output window, operand 0']
    #allocation5 [shape = 's32[2]{0}', space=sflag, size = 0x8, scoped, tag = 'scoped memory for tpu_custom_call.1']
    %9 = vsyncpa [#allocation5], 0
    %s10 = scalar_lea.sflag [#allocation5], 1
    %11 = vsyncpa %s10, 0
    loop: start=0, step=1, limit=8
    $region2: #{tpu_custom_call.1} parent=1 // loop_pre_header
      _
    $region3: #{tpu_custom_call.1} parent=1 // loop_header
      %s13 = sphi 0, %s17
      %p14 = scmp.ge.s32.totalorder %s13, 8
      %s20 = sphi 0, %s32
      %s21 = sphi 0, %s28
      %s22 = sphi 0, %s20
      %s23 = sphi 0, %s21
      %s24 = sphi 0, %s22
      %s25 = sphi 0, %s23
      %s35 = sphi 0, %s37
      %s38 = sphi 0, %s35
      %s39 = sphi 0, %s38
      %s55 = sphi 0, %s39
      %s61 = sphi 0, %s63
      %s64 = sphi 0, %s61
      %s65 = sphi 0, %s64
      %s81 = sphi 0, %s65
      %s87 = sphi 0, %s89
      %s90 = sphi 0, %s87
      %s91 = sphi 0, %s90
      %s107 = sphi 0, %s91
      %s113 = sphi 0, %s115
      %s116 = sphi 0, %s113
      %s117 = sphi 0, %s116
      %s133 = sphi 0, %s117
      %s139 = sphi 0, %s141
      %s142 = sphi 0, %s139
      %s143 = sphi 0, %s142
      %s159 = sphi 0, %s143
    $region4: #{tpu_custom_call.1} parent=1 // loop_header_branch
      %16 = sbr.rel (%p14) target = $region8
    $region5: #{tpu_custom_call.1} parent=1 // loop_body
      %s18 = ssub.s32 %s13, 1
      %s19 = ssub.s32 %s13, 2
      %s26 = sadd.s32 1, %s21
      %p27 = scmp.ge.s32.totalorder %s26, 3
      %s28 = scalar_select %p27, 0, %s26
      %s29 = sadd.s32 1, %s20
      %s30 = scalar_select %p27, %s29, %s20
      %p31 = scmp.ge.s32.totalorder %s30, 2
      %s32 = scalar_select %p31, 0, %s30
      %s33 = ssub.s32 %s20, %s32
      %p34 = scmp.eq.s32.totalorder %s33, 0
      %s36 = sadd.s32 %s35, 1
      %s37 = scalar_select %p34, %s35, %s36
      %p40 = pneg %p34
      %p41 = scmp.eq.s32.totalorder %s13, 5
      %p42 = por %p40, %p41
      %p43 = scmp.ne.s32.totalorder %s35, %s38
      %p44 = scmp.eq.s32.totalorder %s13, 0
      %p45 = por %p43, %p44
      %p46 = scmp.ne.s32.totalorder %s35, %s38
      %p47 = scmp.eq.s32.totalorder %s18, 5
      %p48 = por %p46, %p47
      %p49 = scmp.ne.s32.totalorder %s38, %s39
      %p50 = scmp.eq.s32.totalorder %s18, 0
      %p51 = por %p49, %p50
      %p52 = scmp.ne.s32.totalorder %s38, %s39
      %p53 = scmp.eq.s32.totalorder %s19, 5
      %p54 = por %p52, %p53
      %p56 = scmp.ne.s32.totalorder %s39, %s55
      %p57 = scmp.eq.s32.totalorder %s19, 0
      %p58 = por %p56, %p57
      %s59 = ssub.s32 %s21, %s28
      %p60 = scmp.eq.s32.totalorder %s59, 0
      %s62 = sadd.s32 %s61, 1
      %s63 = scalar_select %p60, %s61, %s62
      %p66 = pneg %p60
      %p67 = scmp.eq.s32.totalorder %s13, 5
      %p68 = por %p66, %p67
      %p69 = scmp.ne.s32.totalorder %s61, %s64
      %p70 = scmp.eq.s32.totalorder %s13, 0
      %p71 = por %p69, %p70
      %p72 = scmp.ne.s32.totalorder %s61, %s64
      %p73 = scmp.eq.s32.totalorder %s18, 5
      %p74 = por %p72, %p73
      %p75 = scmp.ne.s32.totalorder %s64, %s65
      %p76 = scmp.eq.s32.totalorder %s18, 0
      %p77 = por %p75, %p76
      %p78 = scmp.ne.s32.totalorder %s64, %s65
      %p79 = scmp.eq.s32.totalorder %s19, 5
      %p80 = por %p78, %p79
      %p82 = scmp.ne.s32.totalorder %s65, %s81
      %p83 = scmp.eq.s32.totalorder %s19, 0
      %p84 = por %p82, %p83
      %s85 = ssub.s32 %s21, %s28
      %p86 = scmp.eq.s32.totalorder %s85, 0
      %s88 = sadd.s32 %s87, 1
      %s89 = scalar_select %p86, %s87, %s88
      %p92 = pneg %p86
      %p93 = scmp.eq.s32.totalorder %s13, 5
      %p94 = por %p92, %p93
      %p95 = scmp.ne.s32.totalorder %s87, %s90
      %p96 = scmp.eq.s32.totalorder %s13, 0
      %p97 = por %p95, %p96
      %p98 = scmp.ne.s32.totalorder %s87, %s90
      %p99 = scmp.eq.s32.totalorder %s18, 5
      %p100 = por %p98, %p99
      %p101 = scmp.ne.s32.totalorder %s90, %s91
      %p102 = scmp.eq.s32.totalorder %s18, 0
      %p103 = por %p101, %p102
      %p104 = scmp.ne.s32.totalorder %s90, %s91
      %p105 = scmp.eq.s32.totalorder %s19, 5
      %p106 = por %p104, %p105
      %p108 = scmp.ne.s32.totalorder %s91, %s107
      %p109 = scmp.eq.s32.totalorder %s19, 0
      %p110 = por %p108, %p109
      %s111 = ssub.s32 %s21, %s28
      %p112 = scmp.eq.s32.totalorder %s111, 0
      %s114 = sadd.s32 %s113, 1
      %s115 = scalar_select %p112, %s113, %s114
      %p118 = pneg %p112
      %p119 = scmp.eq.s32.totalorder %s13, 5
      %p120 = por %p118, %p119
      %p121 = scmp.ne.s32.totalorder %s113, %s116
      %p122 = scmp.eq.s32.totalorder %s13, 0
      %p123 = por %p121, %p122
      %p124 = scmp.ne.s32.totalorder %s113, %s116
      %p125 = scmp.eq.s32.totalorder %s18, 5
      %p126 = por %p124, %p125
      %p127 = scmp.ne.s32.totalorder %s116, %s117
      %p128 = scmp.eq.s32.totalorder %s18, 0
      %p129 = por %p127, %p128
      %p130 = scmp.ne.s32.totalorder %s116, %s117
      %p131 = scmp.eq.s32.totalorder %s19, 5
      %p132 = por %p130, %p131
      %p134 = scmp.ne.s32.totalorder %s117, %s133
      %p135 = scmp.eq.s32.totalorder %s19, 0
      %p136 = por %p134, %p135
      %s137 = ssub.s32 %s20, %s32
      %p138 = scmp.eq.s32.totalorder %s137, 0
      %s140 = sadd.s32 %s139, 1
      %s141 = scalar_select %p138, %s139, %s140
      %p144 = pneg %p138
      %p145 = scmp.eq.s32.totalorder %s13, 5
      %p146 = por %p144, %p145
      %p147 = scmp.ne.s32.totalorder %s139, %s142
      %p148 = scmp.eq.s32.totalorder %s13, 0
      %p149 = por %p147, %p148
      %p150 = scmp.ne.s32.totalorder %s139, %s142
      %p151 = scmp.eq.s32.totalorder %s18, 5
      %p152 = por %p150, %p151
      %p153 = scmp.ne.s32.totalorder %s142, %s143
      %p154 = scmp.eq.s32.totalorder %s18, 0
      %p155 = por %p153, %p154
      %p156 = scmp.ne.s32.totalorder %s142, %s143
      %p157 = scmp.eq.s32.totalorder %s19, 5
      %p158 = por %p156, %p157
      %p160 = scmp.ne.s32.totalorder %s143, %s159
      %p161 = scmp.eq.s32.totalorder %s19, 0
      %p162 = por %p160, %p161
      %p163 = scmp.le.s32.totalorder 1, %s13
      %p164 = scmp.lt.s32.totalorder %s13, 7
      %p165 = pnand %p163, %p164
      %p166 = pneg %p165
      // Predicated region
      $region9: #{tpu_custom_call.1} parent=5 // pred_check
        _
      $region10: #{tpu_custom_call.1} parent=5 // pred_check_branch
        %168 = sbr.rel (%p165) target = $region12
      $region11: #{tpu_custom_call.1} parent=5 // pred_region
        %s169 = ssub.s32 %s13, 1
      $region12: #{tpu_custom_call.1} parent=5 // pred_fallthru
        _
      %p170 = scmp.lt.s32.totalorder %s13, 6
      // Predicated region
      $region13: #{tpu_custom_call.1} parent=5 // pred_check
        %p171 = pneg %p170
      $region14: #{tpu_custom_call.1} parent=5 // pred_check_branch
        %173 = sbr.rel (%p171) target = $region16
      $region15: #{tpu_custom_call.1} parent=5 // pred_region
        // Predicated region
        $region17: #{tpu_custom_call.1} parent=15 // pred_check
          %p174 = pneg %p45
        $region18: #{tpu_custom_call.1} parent=15 // pred_check_branch
          %176 = sbr.rel (%p174) target = $region20
        $region19: #{tpu_custom_call.1} parent=15 // pred_region
          %p177 = scmp.lt.s32.totalorder %s20, 1
          %s178 = scalar_select %p177, %s20, 1
          %s179 = smul.addr %s178, 8
          %s180 = scalar_lea.vmem %s0, %s179
        $region20: #{tpu_custom_call.1} parent=15 // pred_fallthru
          _
        // Predicated region
        $region21: #{tpu_custom_call.1} parent=15 // pred_check
          %p181 = pneg %p71
        $region22: #{tpu_custom_call.1} parent=15 // pred_check_branch
          %183 = sbr.rel (%p181) target = $region24
        $region23: #{tpu_custom_call.1} parent=15 // pred_region
          %p184 = scmp.lt.s32.totalorder %s21, 2
          %s185 = scalar_select %p184, %s21, 2
          %s186 = smul.addr %s185, 16
          %s187 = smul.addr %s186, 4
          %s188 = scalar_lea.vmem %s1, %s187
        $region24: #{tpu_custom_call.1} parent=15 // pred_fallthru
          _
        // Predicated region
        $region25: #{tpu_custom_call.1} parent=15 // pred_check
          %p189 = pneg %p97
        $region26: #{tpu_custom_call.1} parent=15 // pred_check_branch
          %191 = sbr.rel (%p189) target = $region28
        $region27: #{tpu_custom_call.1} parent=15 // pred_region
          %p192 = scmp.lt.s32.totalorder %s21, 2
          %s193 = scalar_select %p192, %s21, 2
          %s194 = smul.addr %s193, 4
          %s195 = smul.addr %s194, 4
          %s196 = scalar_lea.vmem %s2, %s195
        $region28: #{tpu_custom_call.1} parent=15 // pred_fallthru
          _
        // Predicated region
        $region29: #{tpu_custom_call.1} parent=15 // pred_check
          %p197 = pneg %p123
        $region30: #{tpu_custom_call.1} parent=15 // pred_check_branch
          %199 = sbr.rel (%p197) target = $region32
        $region31: #{tpu_custom_call.1} parent=15 // pred_region
          %p200 = scmp.lt.s32.totalorder %s21, 2
          %s201 = scalar_select %p200, %s21, 2
          %s202 = scalar_lea.vmem %s3, %s201
        $region32: #{tpu_custom_call.1} parent=15 // pred_fallthru
          _
      $region16: #{tpu_custom_call.1} parent=5 // pred_fallthru
        _
      %p203 = scmp.le.s32.totalorder 1, %s13
      %p204 = scmp.lt.s32.totalorder %s13, 7
      %p205 = pnand %p203, %p204
      %p206 = pneg %p205
      // Predicated region
      $region33: #{tpu_custom_call.1} parent=5 // pred_check
        _
      $region34: #{tpu_custom_call.1} parent=5 // pred_check_branch
        %208 = sbr.rel (%p205) target = $region36
      $region35: #{tpu_custom_call.1} parent=5 // pred_region
        %s209 = ssub.s32 %s13, 1
        %p210 = scmp.lt.s32.totalorder %s22, 1
        %s211 = scalar_select %p210, %s22, 1
        %s212 = smul.addr %s211, 8
        %s213 = scalar_lea.vmem %s0, %s212
        %p214 = pneg %p51
        %p215 = pneg %p48
        %p216 = scmp.lt.s32.totalorder %s23, 2
        %s217 = scalar_select %p216, %s23, 2
        %s218 = smul.addr %s217, 16
        %s219 = smul.addr %s218, 4
        %s220 = scalar_lea.vmem %s1, %s219
        %p221 = pneg %p77
        %p222 = pneg %p74
        %p223 = scmp.lt.s32.totalorder %s23, 2
        %s224 = scalar_select %p223, %s23, 2
        %s225 = smul.addr %s224, 4
        %s226 = smul.addr %s225, 4
        %s227 = scalar_lea.vmem %s2, %s226
        %p228 = pneg %p103
        %p229 = pneg %p100
        %p230 = scmp.lt.s32.totalorder %s23, 2
        %s231 = scalar_select %p230, %s23, 2
        %s232 = scalar_lea.vmem %s3, %s231
        %p233 = pneg %p129
        %p234 = pneg %p126
        %p235 = pneg %p155
        %p236 = pneg %p152
        %s237 = sand.u32 %s142, 1
        %s238 = scalar_lea.sflag [#allocation5], %s237
        %s239 = sand.u32 %s142, 1
        %s240 = smul.addr %s239, 8
        %s241 = scalar_lea.vmem [#allocation4], %s240
        %p242 = scmp.lt.s32.totalorder %s22, 1
        %s243 = scalar_select %p242, %s22, 1
        %s244 = smul.addr %s243, 8
        %s245 = scalar_lea.vmem %s0, %s244
        %p246 = scmp.lt.s32.totalorder %s23, 2
        %s247 = scalar_select %p246, %s23, 2
        %s248 = smul.addr %s247, 16
        %s249 = smul.addr %s248, 4
        %s250 = scalar_lea.vmem %s1, %s249
        %p251 = scmp.lt.s32.totalorder %s23, 2
        %s252 = scalar_select %p251, %s23, 2
        %s253 = smul.addr %s252, 4
        %s254 = smul.addr %s253, 4
        %s255 = scalar_lea.vmem %s2, %s254
        %p256 = scmp.lt.s32.totalorder %s23, 2
        %s257 = scalar_select %p256, %s23, 2
        %s258 = scalar_lea.vmem %s3, %s257
        %p260 = scmp.eq.s32.totalorder %s23, 0
        // Predicated region
        $region37: #{tpu_custom_call.1} parent=35 // pred_check
          %p261 = pneg %p260
        $region38: #{tpu_custom_call.1} parent=35 // pred_check_branch
          %263 = sbr.rel (%p261) target = $region40
        $region39: #{tpu_custom_call.1} parent=35 // pred_region
          %v264 = vld [vmem:[%s245] sm:$0xff]
          %vm265 = vcmask 261120
          %266 = vst.msk [vmem:[#allocation2] sm:$0xff] %vm265, %v264
        $region40: #{tpu_custom_call.1} parent=35 // pred_fallthru
          _
        %v267 = vld [vmem:[#allocation2] sm:$0xff]
        %v268 = vpack.c.bf16 %v267, %v267
        %vm269 = vcmask 261120
        %270 = vst.msk [vmem:[#allocation3] sm:$0xff] %vm269, 0.0
        loop: start=0, step=1, limit=4
        $region41: #{tpu_custom_call.1} parent=35 // loop_pre_header
          _
        $region42: #{tpu_custom_call.1} parent=35 // loop_header
          %s272 = sphi 0, %s276
          %p273 = scmp.ge.s32.totalorder %s272, 4
        $region43: #{tpu_custom_call.1} parent=35 // loop_header_branch
          %275 = sbr.rel (%p273) target = $region47
        $region44: #{tpu_custom_call.1} parent=35 // loop_body
          %s277 = smul.u32 %s272, 4
          %s278 = smul.addr %s277, 4
          %s279 = scalar_lea.vmem %s250, %s278
          %v280 = vld [vmem:[%s279] sm:$0xf]
          %v281 = vld [vmem:[%s279 + $0x4] sm:$0xf]
          %v282 = vld [vmem:[%s279 + $0x8] sm:$0xf]
          %v283 = vld [vmem:[%s279 + $0xc] sm:$0xf]
          %v288 = vunpack.c.l.b16 %v280
          %v289 = vunpack.c.l.b16 %v281
          %v290 = vunpack.c.l.b16 %v282
          %v291 = vunpack.c.l.b16 %v283
          %v292 = vpack.c.b16 %v289, %v288
          %v293 = vpack.c.b16 %v291, %v290
          %v297 = vsel %vm269, %v268, 0
          %299 = vmatprep.subr.bf16.mxu0 0
          %300 = vmatpush1.bf16.msra.mxu0 %v292
          %301 = vmatprep.subr.bf16.mxu0 0
          %302 = vmatpush1.bf16.msra.mxu0 %v293
          %303 = vmatprep.subr.bf16.mxu0 0
          %304 = vmatpush1.bf16.msra.mxu0 0
          %305 = vmatprep.subr.bf16.mxu0 0
          %306 = vmatpush1.bf16.msra.mxu0 0
          %307 = vmatprep.subr.bf16.mxu0 0
          %308 = vmatpush1.bf16.msra.mxu0 0
          %309 = vmatprep.subr.bf16.mxu0 0
          %310 = vmatpush1.bf16.msra.mxu0 0
          %311 = vmatprep.subr.bf16.mxu0 0
          %312 = vmatpush1.bf16.msra.mxu0 0
          %313 = vmatprep.subr.bf16.mxu0 0
          %314 = vmatpush1.bf16.msra.mxu0 0
          %315 = vmatprep.subr.bf16.mxu0 0
          %316 = vmatpush1.bf16.msra.mxu0 0
          %317 = vmatprep.subr.bf16.mxu0 0
          %318 = vmatpush1.bf16.msra.mxu0 0
          %319 = vmatprep.subr.bf16.mxu0 0
          %320 = vmatpush1.bf16.msra.mxu0 0
          %321 = vmatprep.subr.bf16.mxu0 0
          %322 = vmatpush1.bf16.msra.mxu0 0
          %323 = vmatprep.subr.bf16.mxu0 0
          %324 = vmatpush1.bf16.msra.mxu0 0
          %325 = vmatprep.subr.bf16.mxu0 0
          %326 = vmatpush1.bf16.msra.mxu0 0
          %327 = vmatprep.subr.bf16.mxu0 0
          %328 = vmatpush1.bf16.msra.mxu0 0
          %329 = vmatprep.subr.bf16.mxu0 0
          %330 = vmatpush1.bf16.msra.mxu0 0
          %331 = vmatprep.mubr.bf16.mxu0 0
          %332 = vmatmul.mubr.bf16.gmra.mrb[0].mxu0 %v297
          %v333 = vpop.f32.mrb[0].mxu0
          %v334 = vadd.f32 0.0, %v333
          %v335 = vpop.f32.mrb[0].mxu0
          %v336 = vpop.f32.mrb[0].mxu0
          %v337 = vpop.f32.mrb[0].mxu0
          %338 = vdwg.mxu0
          %v339 = vpack.c.bf16 %v334, %v334
          %341 = vrot.lane.b32.xlu0 %v339, 120
          %v342 = vpop.permute.xlu0 %341
          %vm343 = vcmask 64512
          %v345 = vsel %vm343, %v339, 0
          %v348 = vsel %vm343, %v342, 0
          %350 = vmatprep.subr.bf16.mxu0 0
          %351 = vmatpush1.bf16.xpose.msra.mxu0 %v348
          %352 = vmatprep.subr.bf16.mxu0 0
          %353 = vmatpush1.bf16.xpose.msra.mxu0 0
          %354 = vmatprep.subr.bf16.mxu0 0
          %355 = vmatpush1.bf16.xpose.msra.mxu0 0
          %356 = vmatprep.subr.bf16.mxu0 0
          %357 = vmatpush1.bf16.xpose.msra.mxu0 0
          %358 = vmatprep.subr.bf16.mxu0 0
          %359 = vmatpush1.bf16.xpose.msra.mxu0 0
          %360 = vmatprep.subr.bf16.mxu0 0
          %361 = vmatpush1.bf16.xpose.msra.mxu0 0
          %362 = vmatprep.subr.bf16.mxu0 0
          %363 = vmatpush1.bf16.xpose.msra.mxu0 0
          %364 = vmatprep.subr.bf16.mxu0 0
          %365 = vmatpush1.bf16.xpose.msra.mxu0 0
          %366 = vmatprep.subr.bf16.mxu0 0
          %367 = vmatpush1.bf16.xpose.msra.mxu0 0
          %368 = vmatprep.subr.bf16.mxu0 0
          %369 = vmatpush1.bf16.xpose.msra.mxu0 0
          %370 = vmatprep.subr.bf16.mxu0 0
          %371 = vmatpush1.bf16.xpose.msra.mxu0 0
          %372 = vmatprep.subr.bf16.mxu0 0
          %373 = vmatpush1.bf16.xpose.msra.mxu0 0
          %374 = vmatprep.subr.bf16.mxu0 0
          %375 = vmatpush1.bf16.xpose.msra.mxu0 0
          %376 = vmatprep.subr.bf16.mxu0 0
          %377 = vmatpush1.bf16.xpose.msra.mxu0 0
          %378 = vmatprep.subr.bf16.mxu0 0
          %379 = vmatpush1.bf16.xpose.msra.mxu0 0
          %380 = vmatprep.subr.bf16.mxu0 0
          %381 = vmatpush1.bf16.xpose.msra.mxu0 0
          %382 = vmatprep.mubr.bf16.mxu0 0
          %383 = vmatmul.mubr.bf16.gmra.mrb[0].mxu0 %v345
          %v384 = vpop.f32.mrb[0].mxu0
          %v385 = vadd.f32 0.0, %v384
          %v386 = vpop.f32.mrb[0].mxu0
          %v387 = vpop.f32.mrb[0].mxu0
          %v388 = vpop.f32.mrb[0].mxu0
          %389 = vdwg.mxu0
          %v390 = vsel %vm343, %v385, -inf
          %391 = vmax.xlane.f32.xlu0 %v390
          %v392 = vpop.xlane.xlu0 %391
          %v393 = vsub.f32 %v385, %v392
          %v394 = vmul.f32 %v393, 1.442695
          %v395 = vpow.pop %v394
          %v396 = vsel %vm343, %v395, 0.0
          %397 = vadd.xlane.f32.xlu0 %v396
          %v398 = vpop.xlane.xlu0 %397
          %v399 = vpack.c.bf16 %v395, %v395
          %400 = vrot.lane.b32.xlu0 %v339, 112
          %v401 = vpop.permute.xlu0 %400
          %v403 = vsel %vm343, %v399, 0
          %vm405 = vcmask 1043456
          %v407 = vsel %vm405, %v401, 0
          %409 = vmatprep.subr.bf16.mxu0 0
          %410 = vmatpush1.bf16.msra.mxu0 %v407
          %411 = vmatprep.subr.bf16.mxu0 0
          %412 = vmatpush1.bf16.msra.mxu0 0
          %413 = vmatprep.subr.bf16.mxu0 0
          %414 = vmatpush1.bf16.msra.mxu0 0
          %415 = vmatprep.subr.bf16.mxu0 0
          %416 = vmatpush1.bf16.msra.mxu0 0
          %417 = vmatprep.subr.bf16.mxu0 0
          %418 = vmatpush1.bf16.msra.mxu0 0
          %419 = vmatprep.subr.bf16.mxu0 0
          %420 = vmatpush1.bf16.msra.mxu0 0
          %421 = vmatprep.subr.bf16.mxu0 0
          %422 = vmatpush1.bf16.msra.mxu0 0
          %423 = vmatprep.subr.bf16.mxu0 0
          %424 = vmatpush1.bf16.msra.mxu0 0
          %425 = vmatprep.subr.bf16.mxu0 0
          %426 = vmatpush1.bf16.msra.mxu0 0
          %427 = vmatprep.subr.bf16.mxu0 0
          %428 = vmatpush1.bf16.msra.mxu0 0
          %429 = vmatprep.subr.bf16.mxu0 0
          %430 = vmatpush1.bf16.msra.mxu0 0
          %431 = vmatprep.subr.bf16.mxu0 0
          %432 = vmatpush1.bf16.msra.mxu0 0
          %433 = vmatprep.subr.bf16.mxu0 0
          %434 = vmatpush1.bf16.msra.mxu0 0
          %435 = vmatprep.subr.bf16.mxu0 0
          %436 = vmatpush1.bf16.msra.mxu0 0
          %437 = vmatprep.subr.bf16.mxu0 0
          %438 = vmatpush1.bf16.msra.mxu0 0
          %439 = vmatprep.subr.bf16.mxu0 0
          %440 = vmatpush1.bf16.msra.mxu0 0
          %441 = vmatprep.mubr.bf16.mxu0 0
          %442 = vmatmul.mubr.bf16.gmra.mrb[0].mxu0 %v403
          %v443 = vpop.f32.mrb[0].mxu0
          %v444 = vadd.f32 0.0, %v443
          %v445 = vpop.f32.mrb[0].mxu0
          %v446 = vpop.f32.mrb[0].mxu0
          %v447 = vpop.f32.mrb[0].mxu0
          %448 = vdwg.mxu0
          %v449 = vrcp.pop %v398
          %v450 = vmul.f32 %v444, %v449
          %v451 = vld [vmem:[#allocation3] sm:$0xff]
          %v452 = vpack.c.bf16 %v450, %v450
          %s453 = smul.addr %s272, 4
          %s454 = scalar_lea.vmem %s255, %s453
          %v455 = vld [vmem:[%s454] sm:$0xf]
          %v457 = vsel %vm343, %v452, 0
          %v460 = vsel %vm405, %v455, 0
          %462 = vmatprep.subr.bf16.mxu0 0
          %463 = vmatpush1.bf16.msra.mxu0 %v460
          %464 = vmatprep.subr.bf16.mxu0 0
          %465 = vmatpush1.bf16.msra.mxu0 0
          %466 = vmatprep.subr.bf16.mxu0 0
          %467 = vmatpush1.bf16.msra.mxu0 0
          %468 = vmatprep.subr.bf16.mxu0 0
          %469 = vmatpush1.bf16.msra.mxu0 0
          %470 = vmatprep.subr.bf16.mxu0 0
          %471 = vmatpush1.bf16.msra.mxu0 0
          %472 = vmatprep.subr.bf16.mxu0 0
          %473 = vmatpush1.bf16.msra.mxu0 0
          %474 = vmatprep.subr.bf16.mxu0 0
          %475 = vmatpush1.bf16.msra.mxu0 0
          %476 = vmatprep.subr.bf16.mxu0 0
          %477 = vmatpush1.bf16.msra.mxu0 0
          %478 = vmatprep.subr.bf16.mxu0 0
          %479 = vmatpush1.bf16.msra.mxu0 0
          %480 = vmatprep.subr.bf16.mxu0 0
          %481 = vmatpush1.bf16.msra.mxu0 0
          %482 = vmatprep.subr.bf16.mxu0 0
          %483 = vmatpush1.bf16.msra.mxu0 0
          %484 = vmatprep.subr.bf16.mxu0 0
          %485 = vmatpush1.bf16.msra.mxu0 0
          %486 = vmatprep.subr.bf16.mxu0 0
          %487 = vmatpush1.bf16.msra.mxu0 0
          %488 = vmatprep.subr.bf16.mxu0 0
          %489 = vmatpush1.bf16.msra.mxu0 0
          %490 = vmatprep.subr.bf16.mxu0 0
          %491 = vmatpush1.bf16.msra.mxu0 0
          %492 = vmatprep.subr.bf16.mxu0 0
          %493 = vmatpush1.bf16.msra.mxu0 0
          %494 = vmatprep.mubr.bf16.mxu0 0
          %495 = vmatmul.mubr.bf16.gmra.mrb[0].mxu0 %v457
          %v496 = vpop.f32.mrb[0].mxu0
          %v497 = vadd.f32 0.0, %v496
          %v498 = vpop.f32.mrb[0].mxu0
          %v499 = vpop.f32.mrb[0].mxu0
          %v500 = vpop.f32.mrb[0].mxu0
          %501 = vdwg.mxu0
          %v502 = vadd.f32 %v451, %v497
          %503 = vst.msk [vmem:[#allocation3] sm:$0xff] %vm269, %v502
        $region45: #{tpu_custom_call.1} parent=35 // loop_footer
          %s276 = sadd.s32 1, %s272
        $region46: #{tpu_custom_call.1} parent=35 // loop_footer_branch
          %271 = sbr.rel target = $region42
        $region47: #{tpu_custom_call.1} parent=35 // loop_exit
          _
        %v504 = vld [vmem:[#allocation3] sm:$0xff]
        %v505 = vld [vmem:[%s258] sm:$0x1]
        %v507 = vlaneseq
        %v508 = vshrl.u32 %v507, 7
        %v509 = vsub.s32 0, %v508
        %v510 = vrot.slane %v505, %v509
        %v512 = vadd.f32 %v504, %v510
        %p513 = scmp.lt.s32.totalorder %s23, 2
        // Predicated region
        $region48: #{tpu_custom_call.1} parent=35 // pred_check
          %p514 = pneg %p513
        $region49: #{tpu_custom_call.1} parent=35 // pred_check_branch
          %516 = sbr.rel (%p514) target = $region51
        $region50: #{tpu_custom_call.1} parent=35 // pred_region
          %v517 = vadd.f32 %v267, %v512
          %518 = vst.msk [vmem:[#allocation2] sm:$0xff] %vm269, %v517
        $region51: #{tpu_custom_call.1} parent=35 // pred_fallthru
          _
        %p519 = scmp.eq.s32.totalorder %s23, 2
        // Predicated region
        $region52: #{tpu_custom_call.1} parent=35 // pred_check
          %p520 = pneg %p519
        $region53: #{tpu_custom_call.1} parent=35 // pred_check_branch
          %522 = sbr.rel (%p520) target = $region55
        $region54: #{tpu_custom_call.1} parent=35 // pred_region
          %523 = vst.msk [vmem:[%s241] sm:$0xff] %vm269, %v512
        $region55: #{tpu_custom_call.1} parent=35 // pred_fallthru
          _
        %s524 = sand.u32 %s142, 1
        %s525 = scalar_lea.sflag [#allocation5], %s524
        %s526 = sand.u32 %s142, 1
        %s527 = smul.addr %s526, 8
        %s528 = scalar_lea.vmem [#allocation4], %s527
        // Predicated region
        $region56: #{tpu_custom_call.1} parent=35 // pred_check
          %p529 = pneg %p152
        $region57: #{tpu_custom_call.1} parent=35 // pred_check_branch
          %531 = sbr.rel (%p529) target = $region59
        $region58: #{tpu_custom_call.1} parent=35 // pred_region
          %s533 = ssub.s32 128, 128
          %534 = vsyncadd %s525, %s533
          %s535 = smul.addr %s22, 128
          %s536 = scalar_lea.hbm %s4, %s535
          %s538 = sshll.u32 %s528, 4
          %s539 = int_to_ptr.vmem [resolvable:$true] %s538
          %541 = dma.vmem_to_hbm [thread:$0]  %s539, 128, %s536, %s525
        $region59: #{tpu_custom_call.1} parent=35 // pred_fallthru
          _
      $region36: #{tpu_custom_call.1} parent=5 // pred_fallthru
        _
      %p542 = scmp.le.s32.totalorder 2, %s13
      // Predicated region
      $region60: #{tpu_custom_call.1} parent=5 // pred_check
        %p543 = pneg %p542
      $region61: #{tpu_custom_call.1} parent=5 // pred_check_branch
        %545 = sbr.rel (%p543) target = $region63
      $region62: #{tpu_custom_call.1} parent=5 // pred_region
        %s546 = ssub.s32 %s13, 2
        // Predicated region
        $region64: #{tpu_custom_call.1} parent=62 // pred_check
          %p547 = pneg %p158
        $region65: #{tpu_custom_call.1} parent=62 // pred_check_branch
          %549 = sbr.rel (%p547) target = $region67
        $region66: #{tpu_custom_call.1} parent=62 // pred_region
          %s550 = sand.u32 %s143, 1
          %s551 = scalar_lea.sflag [#allocation5], %s550
          %s552 = sand.u32 %s143, 1
          %s553 = smul.addr %s552, 8
          %s554 = scalar_lea.vmem [#allocation4], %s553
          %555 = dma.done %s551, 128
        $region67: #{tpu_custom_call.1} parent=62 // pred_fallthru
          _
      $region63: #{tpu_custom_call.1} parent=5 // pred_fallthru
        _
    $region6: #{tpu_custom_call.1} parent=1 // loop_footer
      %s17 = sadd.s32 1, %s13
    $region7: #{tpu_custom_call.1} parent=1 // loop_footer_branch
      %12 = sbr.rel target = $region3
    $region8: #{tpu_custom_call.1} parent=1 // loop_exit
      _
    %556 = vsyncpa [#allocation5], 1
    %s557 = scalar_lea.sflag [#allocation5], 1
    %558 = vsyncpa %s557, 1

</llo_original>
